<compile_context>
chip_gen: v7x
topology: tpu7x:2x2x1
jax: 0.10.0
libtpu: 0.0.40
codegen_flags: <defaults>
</compile_context>

<pallas_src>
import jax
import jax.numpy as jnp
from jax.experimental import pallas as pl
from jax.experimental.pallas import tpu as pltpu


def _round_up(n, m):
    return ((n + m - 1) // m) * m


def _choose_tm(batch):
    """Rows per grid step.

    - >=256 when the batch allows it: fills the 256x256 MXU M dim on v6e/v7x and
      amortizes the ~0.35us fixed per-step grid overhead (at tm=128 the kernel is
      step-overhead bound, not MXU bound).
    - Keep >=2 grid steps when possible so ("parallel",) can use both v7x TCs.
    - Cap at 512 so pipelined x/out tiles + f32 inter-layer activations stay well
      under v5e's 16 MiB scoped-VMEM default without flag bumps.
    """
    batch_al = _round_up(batch, 8)              # sublane alignment
    if batch_al <= 256:
        return batch_al                         # one small step; no padded-row waste
    if batch_al <= 1024:
        return _round_up(pl.cdiv(batch_al, 2), 8)   # exactly 2 steps (v7x: 1 per TC)
    return 512


def mlp_kernel(x_ref,
               w1_ref, b1_ref,
               w2_ref, b2_ref,
               w3_ref, b3_ref,
               w4_ref, b4_ref,
               o_ref):
    # f32 -> bf16 cast happens here, in VMEM, instead of a wrapper HBM pass.
    x = x_ref[...].astype(jnp.bfloat16)

    # MXU matmuls with bf16 operands, f32 accumulation; bias-add + ReLU in f32
    # on the VPU (v5e has no bf16 VPU path; VPU work hides under the MXU slot).
    h = jnp.dot(x, w1_ref[...], preferred_element_type=jnp.float32)
    h = jnp.maximum(h + b1_ref[...], 0.0)

    h = jnp.dot(h.astype(jnp.bfloat16), w2_ref[...],
                preferred_element_type=jnp.float32)
    h = jnp.maximum(h + b2_ref[...], 0.0)

    h = jnp.dot(h.astype(jnp.bfloat16), w3_ref[...],
                preferred_element_type=jnp.float32)
    h = jnp.maximum(h + b3_ref[...], 0.0)

    h = jnp.dot(h.astype(jnp.bfloat16), w4_ref[...],
                preferred_element_type=jnp.float32)
    o_ref[...] = (h + b4_ref[...]).astype(o_ref.dtype)


def mlp_forward(x, params, *, tm=None, out_dtype=jnp.float32):
    """x: [batch, input_size] f32; params: list of (W[in,out] f32, b[1,out] f32).

    tm=None picks a per-batch tile via _choose_tm; pass an explicit multiple of 8
    to sweep.  out_dtype=jnp.bfloat16 halves output writeback bytes if the
    consumer tolerates it.
    """
    batch, in_size = x.shape
    out_size = params[-1][0].shape[1]

    tm = _choose_tm(batch) if tm is None else tm
    grid = (pl.cdiv(batch, tm),)

    # bf16 weights (MXU operands); biases stay f32 (added on the f32 accumulator).
    # Hidden dims (512/256/128) are already multiples of 128; in_size / out_size
    # blocks use the full array dim, so no zero-padding is needed anywhere.
    wbs = [(w.astype(jnp.bfloat16), b.astype(jnp.float32)) for w, b in params]

    flat_args = [x]
    in_specs = [pl.BlockSpec((tm, in_size), lambda i: (i, 0))]
    for w, b in wbs:
        flat_args.extend([w, b])
        # Constant block index => fetched once, VMEM-resident across all steps.
        in_specs.append(pl.BlockSpec(w.shape, lambda i: (0, 0)))
        in_specs.append(pl.BlockSpec(b.shape, lambda i: (0, 0)))

    flops = 2 * batch * sum(int(w.shape[0]) * int(w.shape[1]) for w, _ in wbs)
    bytes_accessed = (
        x.size * x.dtype.itemsize
        + batch * out_size * jnp.dtype(out_dtype).itemsize
        + sum(w.size * w.dtype.itemsize + b.size * b.dtype.itemsize
              for w, b in wbs))

    return pl.pallas_call(
        mlp_kernel,
        out_shape=jax.ShapeDtypeStruct((batch, out_size), out_dtype),
        grid=grid,
        in_specs=in_specs,
        out_specs=pl.BlockSpec((tm, out_size), lambda i: (i, 0)),
        compiler_params=pltpu.CompilerParams(
            dimension_semantics=("parallel",),          # v7x: batch over 2 TCs
            vmem_limit_bytes=(64 * 1024 * 1024 if tm >= 1024 else None)),
        cost_estimate=pl.CostEstimate(
            flops=flops, transcendentals=0, bytes_accessed=bytes_accessed),
    )(*flat_args)


def init_params(key, input_size, output_size):
    """Deterministic init matching the PyTorch module's layer shapes.
    PyTorch Linear stores W as [out, in]; we store the transpose [in, out]."""
    dims = [(input_size, 512), (512, 256), (256, 128), (128, output_size)]
    params = []
    for i, (fan_in, fan_out) in enumerate(dims):
        kw, kb = jax.random.split(jax.random.fold_in(key, i))
        bound = 1.0 / jnp.sqrt(fan_in)
        w = jax.random.uniform(kw, (fan_in, fan_out), jnp.float32, -bound, bound)
        b = jax.random.uniform(kb, (1, fan_out), jnp.float32, -bound, bound)
        params.append((w, b))
    return params


def mlp_reference(x, params, *, emulate_bf16=False):
    h = x
    for i, (w, b) in enumerate(params):
        if emulate_bf16:
            h32 = jnp.dot(h.astype(jnp.bfloat16), w.astype(jnp.bfloat16),
                          preferred_element_type=jnp.float32)
        else:
            h32 = jnp.dot(h, w, preferred_element_type=jnp.float32)
        h = h32 + b
        if i < len(params) - 1:
            h = jnp.maximum(h, 0.0)
    return h


if __name__ == "__main__":
    key = jax.random.PRNGKey(0)
    batch, input_size, output_size = 8, 32, 10

    kx, kp = jax.random.split(key)
    x = jax.random.normal(kx, (batch, input_size), jnp.float32)
    params = init_params(kp, input_size, output_size)

    out = jax.block_until_ready(mlp_forward(x, params))

    ref_bf16 = mlp_reference(x, params, emulate_bf16=True)   # same operand precision
    ref_f32 = mlp_reference(x, params, emulate_bf16=False)   # full-precision sanity

    assert out.shape == (batch, output_size)
    assert jnp.allclose(out, ref_bf16, atol=1e-2, rtol=1e-2), "mismatch vs bf16 reference"
    assert jnp.allclose(out, ref_f32, atol=1e-1, rtol=1e-1), "mismatch vs f32 reference"

    print("KERNEL_OK")
</pallas_src>

<mosaic_0001>
module attributes {stable_mosaic.version = 11 : i64} {
  func.func @mlp_kernel(%arg0: i32, %arg1: memref<8x32xf32, #tpu.memory_space<vmem>>, %arg2: memref<32x512xbf16, #tpu.memory_space<vmem>>, %arg3: memref<1x512xf32, #tpu.memory_space<vmem>>, %arg4: memref<512x256xbf16, #tpu.memory_space<vmem>>, %arg5: memref<1x256xf32, #tpu.memory_space<vmem>>, %arg6: memref<256x128xbf16, #tpu.memory_space<vmem>>, %arg7: memref<1x128xf32, #tpu.memory_space<vmem>>, %arg8: memref<128x10xbf16, #tpu.memory_space<vmem>>, %arg9: memref<1x10xf32, #tpu.memory_space<vmem>>, %arg10: memref<8x10xf32, #tpu.memory_space<vmem>>) attributes {dimension_semantics = [#tpu.dimension_semantics<parallel>], iteration_bounds = array<i64: 1>, scalar_prefetch = 0 : i64, scratch_operands = 0 : i64, tpu.core_type = #tpu.core_type<tc>, window_params = [{transform_indices = @transform_0, window_bounds = array<i64: 8, 32>}, {pipeline_mode = #tpu.pipeline_mode<synchronous>, transform_indices = @transform_1, window_bounds = array<i64: 32, 512>}, {pipeline_mode = #tpu.pipeline_mode<synchronous>, transform_indices = @transform_2, window_bounds = array<i64: 1, 512>}, {pipeline_mode = #tpu.pipeline_mode<synchronous>, transform_indices = @transform_3, window_bounds = array<i64: 512, 256>}, {pipeline_mode = #tpu.pipeline_mode<synchronous>, transform_indices = @transform_4, window_bounds = array<i64: 1, 256>}, {pipeline_mode = #tpu.pipeline_mode<synchronous>, transform_indices = @transform_5, window_bounds = array<i64: 256, 128>}, {pipeline_mode = #tpu.pipeline_mode<synchronous>, transform_indices = @transform_6, window_bounds = array<i64: 1, 128>}, {pipeline_mode = #tpu.pipeline_mode<synchronous>, transform_indices = @transform_7, window_bounds = array<i64: 128, 10>}, {pipeline_mode = #tpu.pipeline_mode<synchronous>, transform_indices = @transform_8, window_bounds = array<i64: 1, 10>}, {transform_indices = @transform_9, window_bounds = array<i64: 8, 10>}]} {
    %c0 = arith.constant 0 : index
    %c0_0 = arith.constant 0 : index
    %0 = vector.load %arg1[%c0, %c0_0] : memref<8x32xf32, #tpu.memory_space<vmem>>, vector<8x32xf32>
    %1 = arith.truncf %0 : vector<8x32xf32> to vector<8x32xbf16>
    %c0_1 = arith.constant 0 : index
    %c0_2 = arith.constant 0 : index
    %2 = vector.load %arg2[%c0_1, %c0_2] : memref<32x512xbf16, #tpu.memory_space<vmem>>, vector<32x512xbf16>
    %cst = arith.constant dense<0.000000e+00> : vector<8x512xf32>
    %3 = tpu.matmul %1, %2, %cst {dimension_numbers = #tpu.dot_dimension_numbers<[1], [0], [0], [1], [0, 0, 1, 1], [], []>} : vector<8x32xbf16>, vector<32x512xbf16>, vector<8x512xf32> -> vector<8x512xf32>
    %c0_3 = arith.constant 0 : index
    %c0_4 = arith.constant 0 : index
    %4 = vector.load %arg3[%c0_3, %c0_4] : memref<1x512xf32, #tpu.memory_space<vmem>>, vector<1x512xf32>
    %5 = vector.broadcast %4 : vector<1x512xf32> to vector<8x512xf32>
    %6 = arith.addf %3, %5 : vector<8x512xf32>
    %cst_5 = arith.constant 0.000000e+00 : f32
    %7 = vector.broadcast %cst_5 : f32 to vector<8x512xf32>
    %8 = arith.maximumf %6, %7 : vector<8x512xf32>
    %9 = arith.truncf %8 : vector<8x512xf32> to vector<8x512xbf16>
    %c0_6 = arith.constant 0 : index
    %c0_7 = arith.constant 0 : index
    %10 = vector.load %arg4[%c0_6, %c0_7] : memref<512x256xbf16, #tpu.memory_space<vmem>>, vector<512x256xbf16>
    %cst_8 = arith.constant dense<0.000000e+00> : vector<8x256xf32>
    %11 = tpu.matmul %9, %10, %cst_8 {dimension_numbers = #tpu.dot_dimension_numbers<[1], [0], [0], [1], [0, 0, 1, 1], [], []>} : vector<8x512xbf16>, vector<512x256xbf16>, vector<8x256xf32> -> vector<8x256xf32>
    %c0_9 = arith.constant 0 : index
    %c0_10 = arith.constant 0 : index
    %12 = vector.load %arg5[%c0_9, %c0_10] : memref<1x256xf32, #tpu.memory_space<vmem>>, vector<1x256xf32>
    %13 = vector.broadcast %12 : vector<1x256xf32> to vector<8x256xf32>
    %14 = arith.addf %11, %13 : vector<8x256xf32>
    %cst_11 = arith.constant 0.000000e+00 : f32
    %15 = vector.broadcast %cst_11 : f32 to vector<8x256xf32>
    %16 = arith.maximumf %14, %15 : vector<8x256xf32>
    %17 = arith.truncf %16 : vector<8x256xf32> to vector<8x256xbf16>
    %c0_12 = arith.constant 0 : index
    %c0_13 = arith.constant 0 : index
    %18 = vector.load %arg6[%c0_12, %c0_13] : memref<256x128xbf16, #tpu.memory_space<vmem>>, vector<256x128xbf16>
    %cst_14 = arith.constant dense<0.000000e+00> : vector<8x128xf32>
    %19 = tpu.matmul %17, %18, %cst_14 {dimension_numbers = #tpu.dot_dimension_numbers<[1], [0], [0], [1], [0, 0, 1, 1], [], []>} : vector<8x256xbf16>, vector<256x128xbf16>, vector<8x128xf32> -> vector<8x128xf32>
    %c0_15 = arith.constant 0 : index
    %c0_16 = arith.constant 0 : index
    %20 = vector.load %arg7[%c0_15, %c0_16] : memref<1x128xf32, #tpu.memory_space<vmem>>, vector<1x128xf32>
    %21 = vector.broadcast %20 : vector<1x128xf32> to vector<8x128xf32>
    %22 = arith.addf %19, %21 : vector<8x128xf32>
    %cst_17 = arith.constant 0.000000e+00 : f32
    %23 = vector.broadcast %cst_17 : f32 to vector<8x128xf32>
    %24 = arith.maximumf %22, %23 : vector<8x128xf32>
    %25 = arith.truncf %24 : vector<8x128xf32> to vector<8x128xbf16>
    %c0_18 = arith.constant 0 : index
    %c0_19 = arith.constant 0 : index
    %26 = vector.load %arg8[%c0_18, %c0_19] : memref<128x10xbf16, #tpu.memory_space<vmem>>, vector<128x10xbf16>
    %cst_20 = arith.constant dense<0.000000e+00> : vector<8x10xf32>
    %27 = tpu.matmul %25, %26, %cst_20 {dimension_numbers = #tpu.dot_dimension_numbers<[1], [0], [0], [1], [0, 0, 1, 1], [], []>} : vector<8x128xbf16>, vector<128x10xbf16>, vector<8x10xf32> -> vector<8x10xf32>
    %c0_21 = arith.constant 0 : index
    %c0_22 = arith.constant 0 : index
    %28 = vector.load %arg9[%c0_21, %c0_22] : memref<1x10xf32, #tpu.memory_space<vmem>>, vector<1x10xf32>
    %29 = vector.broadcast %28 : vector<1x10xf32> to vector<8x10xf32>
    %30 = arith.addf %27, %29 : vector<8x10xf32>
    %c0_23 = arith.constant 0 : index
    %c0_24 = arith.constant 0 : index
    %31 = vector.load %arg10[%c0_23, %c0_24] : memref<8x10xf32, #tpu.memory_space<vmem>>, vector<8x10xf32>
    tpu.vector_store %arg10[%c0_23, %c0_24], %30 {strides = array<i32>} : memref<8x10xf32, #tpu.memory_space<vmem>>, vector<8x10xf32>,
    return
  }
  func.func @transform_0(%arg0: i32) -> (i32, i32) {
    %c0_i32 = arith.constant 0 : i32
    %c0_i32_0 = arith.constant 0 : i32
    return %arg0, %c0_i32 : i32, i32
  }
  func.func @transform_1(%arg0: i32) -> (i32, i32) {
    %c0_i32 = arith.constant 0 : i32
    %c0_i32_0 = arith.constant 0 : i32
    %c0_i32_1 = arith.constant 0 : i32
    return %c0_i32, %c0_i32_0 : i32, i32
  }
  func.func @transform_2(%arg0: i32) -> (i32, i32) {
    %c0_i32 = arith.constant 0 : i32
    %c0_i32_0 = arith.constant 0 : i32
    %c0_i32_1 = arith.constant 0 : i32
    return %c0_i32, %c0_i32_0 : i32, i32
  }
  func.func @transform_3(%arg0: i32) -> (i32, i32) {
    %c0_i32 = arith.constant 0 : i32
    %c0_i32_0 = arith.constant 0 : i32
    %c0_i32_1 = arith.constant 0 : i32
    return %c0_i32, %c0_i32_0 : i32, i32
  }
  func.func @transform_4(%arg0: i32) -> (i32, i32) {
    %c0_i32 = arith.constant 0 : i32
    %c0_i32_0 = arith.constant 0 : i32
    %c0_i32_1 = arith.constant 0 : i32
    return %c0_i32, %c0_i32_0 : i32, i32
  }
  func.func @transform_5(%arg0: i32) -> (i32, i32) {
    %c0_i32 = arith.constant 0 : i32
    %c0_i32_0 = arith.constant 0 : i32
    %c0_i32_1 = arith.constant 0 : i32
    return %c0_i32, %c0_i32_0 : i32, i32
  }
  func.func @transform_6(%arg0: i32) -> (i32, i32) {
    %c0_i32 = arith.constant 0 : i32
    %c0_i32_0 = arith.constant 0 : i32
    %c0_i32_1 = arith.constant 0 : i32
    return %c0_i32, %c0_i32_0 : i32, i32
  }
  func.func @transform_7(%arg0: i32) -> (i32, i32) {
    %c0_i32 = arith.constant 0 : i32
    %c0_i32_0 = arith.constant 0 : i32
    %c0_i32_1 = arith.constant 0 : i32
    return %c0_i32, %c0_i32_0 : i32, i32
  }
  func.func @transform_8(%arg0: i32) -> (i32, i32) {
    %c0_i32 = arith.constant 0 : i32
    %c0_i32_0 = arith.constant 0 : i32
    %c0_i32_1 = arith.constant 0 : i32
    return %c0_i32, %c0_i32_0 : i32, i32
  }
  func.func @transform_9(%arg0: i32) -> (i32, i32) {
    %c0_i32 = arith.constant 0 : i32
    %c0_i32_0 = arith.constant 0 : i32
    return %arg0, %c0_i32 : i32, i32
  }
}

</mosaic_0001>

<llo_original>
// kernel: tpu_custom_call.1
$region0: #{tpu_custom_call.1}
  #allocation0 [shape = 'u32[]', space=smem, size = 0x4, offset = 0x4, fixed_abs, tag = 'smem constant byte address 0x4 - core index']
  #allocation1 [shape = 'u32[144,128]{1,0:T(1,128)}', space=vmem, size = 0x12000, scoped, tag = 'internal scratch']
  %s0 = inlined_call_operand.vmem [shape: f32[8,32], index: 0, kind: input, shape index: {}]
  %s1 = inlined_call_operand.vmem [shape: bf16[32,512], index: 1, kind: input, shape index: {}]
  %s2 = inlined_call_operand.vmem [shape: f32[1,512], index: 2, kind: input, shape index: {}]
  %s3 = inlined_call_operand.hbm [shape: bf16[512,256], index: 3, kind: input, shape index: {}]
  %s4 = inlined_call_operand.vmem [shape: f32[1,256], index: 4, kind: input, shape index: {}]
  %s5 = inlined_call_operand.hbm [shape: bf16[256,128], index: 5, kind: input, shape index: {}]
  %s6 = inlined_call_operand.vmem [shape: f32[1,128], index: 6, kind: input, shape index: {}]
  %s7 = inlined_call_operand.vmem [shape: bf16[128,10], index: 7, kind: input, shape index: {}]
  %s8 = inlined_call_operand.vmem [shape: f32[1,10], index: 8, kind: input, shape index: {}]
  %s9 = inlined_call_operand.hbm [shape: f32[8,10], index: 9, kind: output, shape index: {}]
  %s10 = sld [smem:[#allocation0]]
  $region54: #{tpu_custom_call.1} parent=0
    _
  %s12 = ssub.s32 1, %s10
  %s13 = scalar_select 0, %s12, %s10
  $region1: #{tpu_custom_call.1} parent=0
    #allocation2 [shape = 'u8[262144]{0}', space=vmem, size = 0x40000, scoped, tag = 'input window, operand 3, single buffered']
    #allocation3 [shape = 's32[1]{0}', space=sflag, size = 0x4, scoped, tag = 'scoped memory for tpu_custom_call.1']
    #allocation4 [shape = 's32[1]{0}', space=sflag, size = 0x4, scoped, tag = 'scoped memory for tpu_custom_call.1']
    #allocation5 [shape = 'u8[65536]{0}', space=vmem, size = 0x10000, scoped, tag = 'input window, operand 5, single buffered']
    #allocation6 [shape = 's32[1]{0}', space=sflag, size = 0x4, scoped, tag = 'scoped memory for tpu_custom_call.1']
    #allocation7 [shape = 'u8[4096]{0}', space=vmem, size = 0x1000, scoped, tag = 'output window, operand 0, single buffered']
    %14 = vsyncpa [#allocation3], 0
    %15 = vsyncpa [#allocation6], 0
    %16 = vsyncpa [#allocation4], 0
    // Predicated region
    $region2: #{tpu_custom_call.1} parent=1 // pred_check
      _
    $region3: #{tpu_custom_call.1} parent=1 // pred_check_branch
      %18 = sbr.rel (0) target = $region5
    $region4: #{tpu_custom_call.1} parent=1 // pred_region
      _
    $region5: #{tpu_custom_call.1} parent=1 // pred_fallthru
      _
    // Predicated region
    $region6: #{tpu_custom_call.1} parent=1 // pred_check
      _
    $region7: #{tpu_custom_call.1} parent=1 // pred_check_branch
      %20 = sbr.rel (0) target = $region9
    $region8: #{tpu_custom_call.1} parent=1 // pred_region
      _
    $region9: #{tpu_custom_call.1} parent=1 // pred_fallthru
      _
    // Predicated region
    $region10: #{tpu_custom_call.1} parent=1 // pred_check
      _
    $region11: #{tpu_custom_call.1} parent=1 // pred_check_branch
      %22 = sbr.rel (0) target = $region13
    $region12: #{tpu_custom_call.1} parent=1 // pred_region
      _
    $region13: #{tpu_custom_call.1} parent=1 // pred_fallthru
      _
    // Predicated region
    $region14: #{tpu_custom_call.1} parent=1 // pred_check
      _
    $region15: #{tpu_custom_call.1} parent=1 // pred_check_branch
      %24 = sbr.rel (0) target = $region17
    $region16: #{tpu_custom_call.1} parent=1 // pred_region
      %s26 = ssub.s32 8192, 8192
      %27 = vsyncadd [#allocation3], %s26
      %s28 = sshll.u32 [#allocation2], 4
      %s29 = int_to_ptr.vmem [resolvable:$true] %s28
      %34 = dma.hbm_to_vmem [thread:$0]  %s3, 8192, %s29, [#allocation3], 128, 128, 8
    $region17: #{tpu_custom_call.1} parent=1 // pred_fallthru
      _
    // Predicated region
    $region18: #{tpu_custom_call.1} parent=1 // pred_check
      _
    $region19: #{tpu_custom_call.1} parent=1 // pred_check_branch
      %36 = sbr.rel (0) target = $region21
    $region20: #{tpu_custom_call.1} parent=1 // pred_region
      _
    $region21: #{tpu_custom_call.1} parent=1 // pred_fallthru
      _
    // Predicated region
    $region22: #{tpu_custom_call.1} parent=1 // pred_check
      _
    $region23: #{tpu_custom_call.1} parent=1 // pred_check_branch
      %38 = sbr.rel (0) target = $region25
    $region24: #{tpu_custom_call.1} parent=1 // pred_region
      %s40 = ssub.s32 2048, 2048
      %41 = vsyncadd [#allocation6], %s40
      %s42 = sshll.u32 [#allocation5], 4
      %s43 = int_to_ptr.vmem [resolvable:$true] %s42
      %48 = dma.hbm_to_vmem [thread:$0]  %s5, 2048, %s43, [#allocation6], 64, 64, 4
    $region25: #{tpu_custom_call.1} parent=1 // pred_fallthru
      _
    // Predicated region
    $region26: #{tpu_custom_call.1} parent=1 // pred_check
      _
    $region27: #{tpu_custom_call.1} parent=1 // pred_check_branch
      %50 = sbr.rel (0) target = $region29
    $region28: #{tpu_custom_call.1} parent=1 // pred_region
      _
    $region29: #{tpu_custom_call.1} parent=1 // pred_fallthru
      _
    // Predicated region
    $region30: #{tpu_custom_call.1} parent=1 // pred_check
      _
    $region31: #{tpu_custom_call.1} parent=1 // pred_check_branch
      %52 = sbr.rel (0) target = $region33
    $region32: #{tpu_custom_call.1} parent=1 // pred_region
      _
    $region33: #{tpu_custom_call.1} parent=1 // pred_fallthru
      _
    // Predicated region
    $region34: #{tpu_custom_call.1} parent=1 // pred_check
      _
    $region35: #{tpu_custom_call.1} parent=1 // pred_check_branch
      %54 = sbr.rel (0) target = $region37
    $region36: #{tpu_custom_call.1} parent=1 // pred_region
      _
    $region37: #{tpu_custom_call.1} parent=1 // pred_fallthru
      _
    // Predicated region
    $region38: #{tpu_custom_call.1} parent=1 // pred_check
      _
    $region39: #{tpu_custom_call.1} parent=1 // pred_check_branch
      %56 = sbr.rel (0) target = $region41
    $region40: #{tpu_custom_call.1} parent=1 // pred_region
      %57 = dma.done [#allocation3], 8192
    $region41: #{tpu_custom_call.1} parent=1 // pred_fallthru
      _
    // Predicated region
    $region42: #{tpu_custom_call.1} parent=1 // pred_check
      _
    $region43: #{tpu_custom_call.1} parent=1 // pred_check_branch
      %59 = sbr.rel (0) target = $region45
    $region44: #{tpu_custom_call.1} parent=1 // pred_region
      %60 = dma.done [#allocation6], 2048
    $region45: #{tpu_custom_call.1} parent=1 // pred_fallthru
      _
    %v62 = vld [vmem:[%s0] sm:$0xff]
    %v63 = vpack.c.bf16 %v62, %v62
    %v64 = vld [vmem:[%s1] sm:$0xff]
    %v65 = vld [vmem:[%s1 + $0x8] sm:$0xff]
    %v66 = vld [vmem:[%s1 + $0x10] sm:$0xff]
    %v67 = vld [vmem:[%s1 + $0x18] sm:$0xff]
    %v68 = vld [vmem:[%s1 + $0x20] sm:$0xff]
    %v69 = vld [vmem:[%s1 + $0x28] sm:$0xff]
    %v70 = vld [vmem:[%s1 + $0x30] sm:$0xff]
    %v71 = vld [vmem:[%s1 + $0x38] sm:$0xff]
    %v72 = vld [vmem:[%s2] sm:$0xf]
    %v74 = vlaneseq
    %v75 = vshrl.u32 %v74, 7
    %v76 = vsub.s32 0, %v75
    %v77 = vrot.slane %v72, %v76
    %v78 = vlaneseq
    %v79 = vshrl.u32 %v78, 7
    %v80 = vsub.s32 1, %v79
    %v81 = vrot.slane %v72, %v80
    %v82 = vlaneseq
    %v83 = vshrl.u32 %v82, 7
    %v84 = vsub.s32 2, %v83
    %v85 = vrot.slane %v72, %v84
    %v86 = vlaneseq
    %v87 = vshrl.u32 %v86, 7
    %v88 = vsub.s32 3, %v87
    %v89 = vrot.slane %v72, %v88
    %v102 = vunpack.c.l.b16 %v64
    %v103 = vunpack.c.h.b16 %v64
    %v104 = vunpack.c.l.b16 %v65
    %v105 = vunpack.c.h.b16 %v65
    %v106 = vunpack.c.l.b16 %v66
    %v107 = vunpack.c.h.b16 %v66
    %v108 = vunpack.c.l.b16 %v67
    %v109 = vunpack.c.h.b16 %v67
    %v110 = vunpack.c.l.b16 %v68
    %v111 = vunpack.c.h.b16 %v68
    %v112 = vunpack.c.l.b16 %v69
    %v113 = vunpack.c.h.b16 %v69
    %v114 = vunpack.c.l.b16 %v70
    %v115 = vunpack.c.h.b16 %v70
    %v116 = vunpack.c.l.b16 %v71
    %v117 = vunpack.c.h.b16 %v71
    %v118 = vpack.c.b16 %v106, %v102
    %v119 = vpack.c.b16 %v107, %v103
    %v120 = vpack.c.b16 %v108, %v104
    %v121 = vpack.c.b16 %v109, %v105
    %v122 = vpack.c.b16 %v114, %v110
    %v123 = vpack.c.b16 %v115, %v111
    %v124 = vpack.c.b16 %v116, %v112
    %v125 = vpack.c.b16 %v117, %v113
    %vm134 = vcmask 261120
    %v136 = vsel %vm134, %v63, 0
    %138 = vmatprep.subr.bf16.mxu0 %v119
    %139 = vmatpush1.bf16.msra.mxu0 %v118
    %140 = vmatprep.subr.bf16.mxu0 %v123
    %141 = vmatpush1.bf16.msra.mxu0 %v122
    %142 = vmatprep.subr.bf16.mxu0 0
    %143 = vmatpush1.bf16.msra.mxu0 0
    %144 = vmatprep.subr.bf16.mxu0 0
    %145 = vmatpush1.bf16.msra.mxu0 0
    %146 = vmatprep.subr.bf16.mxu0 0
    %147 = vmatpush1.bf16.msra.mxu0 0
    %148 = vmatprep.subr.bf16.mxu0 0
    %149 = vmatpush1.bf16.msra.mxu0 0
    %150 = vmatprep.subr.bf16.mxu0 0
    %151 = vmatpush1.bf16.msra.mxu0 0
    %152 = vmatprep.subr.bf16.mxu0 0
    %153 = vmatpush1.bf16.msra.mxu0 0
    %154 = vmatprep.subr.bf16.mxu0 0
    %155 = vmatpush1.bf16.msra.mxu0 0
    %156 = vmatprep.subr.bf16.mxu0 0
    %157 = vmatpush1.bf16.msra.mxu0 0
    %158 = vmatprep.subr.bf16.mxu0 0
    %159 = vmatpush1.bf16.msra.mxu0 0
    %160 = vmatprep.subr.bf16.mxu0 0
    %161 = vmatpush1.bf16.msra.mxu0 0
    %162 = vmatprep.subr.bf16.mxu0 0
    %163 = vmatpush1.bf16.msra.mxu0 0
    %164 = vmatprep.subr.bf16.mxu0 0
    %165 = vmatpush1.bf16.msra.mxu0 0
    %166 = vmatprep.subr.bf16.mxu0 0
    %167 = vmatpush1.bf16.msra.mxu0 0
    %168 = vmatprep.subr.bf16.mxu0 0
    %169 = vmatpush1.bf16.msra.mxu0 0
    %170 = vmatprep.mubr.bf16.mxu0 0
    %171 = vmatmul.mubr.bf16.gmra.mrb[0].mxu0 %v136
    %v172 = vpop.f32.mrb[0].mxu0
    %v173 = vadd.f32 %v77, %v172
    %v174 = vpop.f32.mrb[0].mxu0
    %v175 = vadd.f32 %v81, %v174
    %v176 = vpop.f32.mrb[0].mxu0
    %v177 = vpop.f32.mrb[0].mxu0
    %178 = vdwg.mxu0
    %179 = vmatprep.subr.bf16.mxu0 %v121
    %180 = vmatpush1.bf16.msra.mxu0 %v120
    %181 = vmatprep.subr.bf16.mxu0 %v125
    %182 = vmatpush1.bf16.msra.mxu0 %v124
    %183 = vmatprep.subr.bf16.mxu0 0
    %184 = vmatpush1.bf16.msra.mxu0 0
    %185 = vmatprep.subr.bf16.mxu0 0
    %186 = vmatpush1.bf16.msra.mxu0 0
    %187 = vmatprep.subr.bf16.mxu0 0
    %188 = vmatpush1.bf16.msra.mxu0 0
    %189 = vmatprep.subr.bf16.mxu0 0
    %190 = vmatpush1.bf16.msra.mxu0 0
    %191 = vmatprep.subr.bf16.mxu0 0
    %192 = vmatpush1.bf16.msra.mxu0 0
    %193 = vmatprep.subr.bf16.mxu0 0
    %194 = vmatpush1.bf16.msra.mxu0 0
    %195 = vmatprep.subr.bf16.mxu0 0
    %196 = vmatpush1.bf16.msra.mxu0 0
    %197 = vmatprep.subr.bf16.mxu0 0
    %198 = vmatpush1.bf16.msra.mxu0 0
    %199 = vmatprep.subr.bf16.mxu0 0
    %200 = vmatpush1.bf16.msra.mxu0 0
    %201 = vmatprep.subr.bf16.mxu0 0
    %202 = vmatpush1.bf16.msra.mxu0 0
    %203 = vmatprep.subr.bf16.mxu0 0
    %204 = vmatpush1.bf16.msra.mxu0 0
    %205 = vmatprep.subr.bf16.mxu0 0
    %206 = vmatpush1.bf16.msra.mxu0 0
    %207 = vmatprep.subr.bf16.mxu0 0
    %208 = vmatpush1.bf16.msra.mxu0 0
    %209 = vmatprep.subr.bf16.mxu0 0
    %210 = vmatpush1.bf16.msra.mxu0 0
    %211 = vmatprep.mubr.bf16.mxu0 0
    %212 = vmatmul.mubr.bf16.gmra.mrb[0].mxu0 %v136
    %v213 = vpop.f32.mrb[0].mxu0
    %v214 = vadd.f32 %v85, %v213
    %v215 = vpop.f32.mrb[0].mxu0
    %v216 = vadd.f32 %v89, %v215
    %v217 = vpop.f32.mrb[0].mxu0
    %v218 = vpop.f32.mrb[0].mxu0
    %219 = vdwg.mxu0
    %v220 = vmax.f32 %v173, 0.0
    %v221 = vmax.f32 %v175, 0.0
    %v222 = vmax.f32 %v214, 0.0
    %v223 = vmax.f32 %v216, 0.0
    %v224 = vpack.c.bf16 %v220, %v220
    %v225 = vpack.c.bf16 %v221, %v221
    %v226 = vpack.c.bf16 %v222, %v222
    %v227 = vpack.c.bf16 %v223, %v223
    %v228 = vld [vmem:[#allocation2] sm:$0xff]
    %v229 = vld [vmem:[#allocation2 + $0x8] sm:$0xff]
    %v230 = vld [vmem:[#allocation2 + $0x10] sm:$0xff]
    %v231 = vld [vmem:[#allocation2 + $0x18] sm:$0xff]
    %v232 = vld [vmem:[#allocation2 + $0x20] sm:$0xff]
    %v233 = vld [vmem:[#allocation2 + $0x28] sm:$0xff]
    %v234 = vld [vmem:[#allocation2 + $0x30] sm:$0xff]
    %v235 = vld [vmem:[#allocation2 + $0x38] sm:$0xff]
    %v236 = vld [vmem:[#allocation2 + $0x40] sm:$0xff]
    %v237 = vld [vmem:[#allocation2 + $0x48] sm:$0xff]
    %v238 = vld [vmem:[#allocation2 + $0x50] sm:$0xff]
    %v239 = vld [vmem:[#allocation2 + $0x58] sm:$0xff]
    %v240 = vld [vmem:[#allocation2 + $0x60] sm:$0xff]
    %v241 = vld [vmem:[#allocation2 + $0x68] sm:$0xff]
    %v242 = vld [vmem:[#allocation2 + $0x70] sm:$0xff]
    %v243 = vld [vmem:[#allocation2 + $0x78] sm:$0xff]
    %v244 = vld [vmem:[#allocation2 + $0x80] sm:$0xff]
    %v245 = vld [vmem:[#allocation2 + $0x88] sm:$0xff]
    %v246 = vld [vmem:[#allocation2 + $0x90] sm:$0xff]
    %v247 = vld [vmem:[#allocation2 + $0x98] sm:$0xff]
    %v248 = vld [vmem:[#allocation2 + $0xa0] sm:$0xff]
    %v249 = vld [vmem:[#allocation2 + $0xa8] sm:$0xff]
    %v250 = vld [vmem:[#allocation2 + $0xb0] sm:$0xff]
    %v251 = vld [vmem:[#allocation2 + $0xb8] sm:$0xff]
    %v252 = vld [vmem:[#allocation2 + $0xc0] sm:$0xff]
    %v253 = vld [vmem:[#allocation2 + $0xc8] sm:$0xff]
    %v254 = vld [vmem:[#allocation2 + $0xd0] sm:$0xff]
    %v255 = vld [vmem:[#allocation2 + $0xd8] sm:$0xff]
    %v256 = vld [vmem:[#allocation2 + $0xe0] sm:$0xff]
    %v257 = vld [vmem:[#allocation2 + $0xe8] sm:$0xff]
    %v258 = vld [vmem:[#allocation2 + $0xf0] sm:$0xff]
    %v259 = vld [vmem:[#allocation2 + $0xf8] sm:$0xff]
    %v260 = vld [vmem:[#allocation2 + $0x100] sm:$0xff]
    %v261 = vld [vmem:[#allocation2 + $0x108] sm:$0xff]
    %v262 = vld [vmem:[#allocation2 + $0x110] sm:$0xff]
    %v263 = vld [vmem:[#allocation2 + $0x118] sm:$0xff]
    %v264 = vld [vmem:[#allocation2 + $0x120] sm:$0xff]
    %v265 = vld [vmem:[#allocation2 + $0x128] sm:$0xff]
    %v266 = vld [vmem:[#allocation2 + $0x130] sm:$0xff]
    %v267 = vld [vmem:[#allocation2 + $0x138] sm:$0xff]
    %v268 = vld [vmem:[#allocation2 + $0x140] sm:$0xff]
    %v269 = vld [vmem:[#allocation2 + $0x148] sm:$0xff]
    %v270 = vld [vmem:[#allocation2 + $0x150] sm:$0xff]
    %v271 = vld [vmem:[#allocation2 + $0x158] sm:$0xff]
    %v272 = vld [vmem:[#allocation2 + $0x160] sm:$0xff]
    %v273 = vld [vmem:[#allocation2 + $0x168] sm:$0xff]
    %v274 = vld [vmem:[#allocation2 + $0x170] sm:$0xff]
    %v275 = vld [vmem:[#allocation2 + $0x178] sm:$0xff]
    %v276 = vld [vmem:[#allocation2 + $0x180] sm:$0xff]
    %v277 = vld [vmem:[#allocation2 + $0x188] sm:$0xff]
    %v278 = vld [vmem:[#allocation2 + $0x190] sm:$0xff]
    %v279 = vld [vmem:[#allocation2 + $0x198] sm:$0xff]
    %v280 = vld [vmem:[#allocation2 + $0x1a0] sm:$0xff]
    %v281 = vld [vmem:[#allocation2 + $0x1a8] sm:$0xff]
    %v282 = vld [vmem:[#allocation2 + $0x1b0] sm:$0xff]
    %v283 = vld [vmem:[#allocation2 + $0x1b8] sm:$0xff]
    %v284 = vld [vmem:[#allocation2 + $0x1c0] sm:$0xff]
    %v285 = vld [vmem:[#allocation2 + $0x1c8] sm:$0xff]
    %v286 = vld [vmem:[#allocation2 + $0x1d0] sm:$0xff]
    %v287 = vld [vmem:[#allocation2 + $0x1d8] sm:$0xff]
    %v288 = vld [vmem:[#allocation2 + $0x1e0] sm:$0xff]
    %v289 = vld [vmem:[#allocation2 + $0x1e8] sm:$0xff]
    %v290 = vld [vmem:[#allocation2 + $0x1f0] sm:$0xff]
    %v291 = vld [vmem:[#allocation2 + $0x1f8] sm:$0xff]
    %v292 = vld [vmem:[%s4] sm:$0x3]
    %v294 = vlaneseq
    %v295 = vshrl.u32 %v294, 7
    %v296 = vsub.s32 0, %v295
    %v297 = vrot.slane %v292, %v296
    %v298 = vlaneseq
    %v299 = vshrl.u32 %v298, 7
    %v300 = vsub.s32 1, %v299
    %v301 = vrot.slane %v292, %v300
    %v368 = vunpack.c.l.b16 %v228
    %v369 = vunpack.c.h.b16 %v228
    %v370 = vunpack.c.l.b16 %v229
    %v371 = vunpack.c.h.b16 %v229
    %v372 = vunpack.c.l.b16 %v230
    %v373 = vunpack.c.h.b16 %v230
    %v374 = vunpack.c.l.b16 %v231
    %v375 = vunpack.c.h.b16 %v231
    %v376 = vunpack.c.l.b16 %v232
    %v377 = vunpack.c.h.b16 %v232
    %v378 = vunpack.c.l.b16 %v233
    %v379 = vunpack.c.h.b16 %v233
    %v380 = vunpack.c.l.b16 %v234
    %v381 = vunpack.c.h.b16 %v234
    %v382 = vunpack.c.l.b16 %v235
    %v383 = vunpack.c.h.b16 %v235
    %v384 = vunpack.c.l.b16 %v236
    %v385 = vunpack.c.h.b16 %v236
    %v386 = vunpack.c.l.b16 %v237
    %v387 = vunpack.c.h.b16 %v237
    %v388 = vunpack.c.l.b16 %v238
    %v389 = vunpack.c.h.b16 %v238
    %v390 = vunpack.c.l.b16 %v239
    %v391 = vunpack.c.h.b16 %v239
    %v392 = vunpack.c.l.b16 %v240
    %v393 = vunpack.c.h.b16 %v240
    %v394 = vunpack.c.l.b16 %v241
    %v395 = vunpack.c.h.b16 %v241
    %v396 = vunpack.c.l.b16 %v242
    %v397 = vunpack.c.h.b16 %v242
    %v398 = vunpack.c.l.b16 %v243
    %v399 = vunpack.c.h.b16 %v243
    %v400 = vunpack.c.l.b16 %v244
    %v401 = vunpack.c.h.b16 %v244
    %v402 = vunpack.c.l.b16 %v245
    %v403 = vunpack.c.h.b16 %v245
    %v404 = vunpack.c.l.b16 %v246
    %v405 = vunpack.c.h.b16 %v246
    %v406 = vunpack.c.l.b16 %v247
    %v407 = vunpack.c.h.b16 %v247
    %v408 = vunpack.c.l.b16 %v248
    %v409 = vunpack.c.h.b16 %v248
    %v410 = vunpack.c.l.b16 %v249
    %v411 = vunpack.c.h.b16 %v249
    %v412 = vunpack.c.l.b16 %v250
    %v413 = vunpack.c.h.b16 %v250
    %v414 = vunpack.c.l.b16 %v251
    %v415 = vunpack.c.h.b16 %v251
    %v416 = vunpack.c.l.b16 %v252
    %v417 = vunpack.c.h.b16 %v252
    %v418 = vunpack.c.l.b16 %v253
    %v419 = vunpack.c.h.b16 %v253
    %v420 = vunpack.c.l.b16 %v254
    %v421 = vunpack.c.h.b16 %v254
    %v422 = vunpack.c.l.b16 %v255
    %v423 = vunpack.c.h.b16 %v255
    %v424 = vunpack.c.l.b16 %v256
    %v425 = vunpack.c.h.b16 %v256
    %v426 = vunpack.c.l.b16 %v257
    %v427 = vunpack.c.h.b16 %v257
    %v428 = vunpack.c.l.b16 %v258
    %v429 = vunpack.c.h.b16 %v258
    %v430 = vunpack.c.l.b16 %v259
    %v431 = vunpack.c.h.b16 %v259
    %v432 = vunpack.c.l.b16 %v260
    %v433 = vunpack.c.h.b16 %v260
    %v434 = vunpack.c.l.b16 %v261
    %v435 = vunpack.c.h.b16 %v261
    %v436 = vunpack.c.l.b16 %v262
    %v437 = vunpack.c.h.b16 %v262
    %v438 = vunpack.c.l.b16 %v263
    %v439 = vunpack.c.h.b16 %v263
    %v440 = vunpack.c.l.b16 %v264
    %v441 = vunpack.c.h.b16 %v264
    %v442 = vunpack.c.l.b16 %v265
    %v443 = vunpack.c.h.b16 %v265
    %v444 = vunpack.c.l.b16 %v266
    %v445 = vunpack.c.h.b16 %v266
    %v446 = vunpack.c.l.b16 %v267
    %v447 = vunpack.c.h.b16 %v267
    %v448 = vunpack.c.l.b16 %v268
    %v449 = vunpack.c.h.b16 %v268
    %v450 = vunpack.c.l.b16 %v269
    %v451 = vunpack.c.h.b16 %v269
    %v452 = vunpack.c.l.b16 %v270
    %v453 = vunpack.c.h.b16 %v270
    %v454 = vunpack.c.l.b16 %v271
    %v455 = vunpack.c.h.b16 %v271
    %v456 = vunpack.c.l.b16 %v272
    %v457 = vunpack.c.h.b16 %v272
    %v458 = vunpack.c.l.b16 %v273
    %v459 = vunpack.c.h.b16 %v273
    %v460 = vunpack.c.l.b16 %v274
    %v461 = vunpack.c.h.b16 %v274
    %v462 = vunpack.c.l.b16 %v275
    %v463 = vunpack.c.h.b16 %v275
    %v464 = vunpack.c.l.b16 %v276
    %v465 = vunpack.c.h.b16 %v276
    %v466 = vunpack.c.l.b16 %v277
    %v467 = vunpack.c.h.b16 %v277
    %v468 = vunpack.c.l.b16 %v278
    %v469 = vunpack.c.h.b16 %v278
    %v470 = vunpack.c.l.b16 %v279
    %v471 = vunpack.c.h.b16 %v279
    %v472 = vunpack.c.l.b16 %v280
    %v473 = vunpack.c.h.b16 %v280
    %v474 = vunpack.c.l.b16 %v281
    %v475 = vunpack.c.h.b16 %v281
    %v476 = vunpack.c.l.b16 %v282
    %v477 = vunpack.c.h.b16 %v282
    %v478 = vunpack.c.l.b16 %v283
    %v479 = vunpack.c.h.b16 %v283
    %v480 = vunpack.c.l.b16 %v284
    %v481 = vunpack.c.h.b16 %v284
    %v482 = vunpack.c.l.b16 %v285
    %v483 = vunpack.c.h.b16 %v285
    %v484 = vunpack.c.l.b16 %v286
    %v485 = vunpack.c.h.b16 %v286
    %v486 = vunpack.c.l.b16 %v287
    %v487 = vunpack.c.h.b16 %v287
    %v488 = vunpack.c.l.b16 %v288
    %v489 = vunpack.c.h.b16 %v288
    %v490 = vunpack.c.l.b16 %v289
    %v491 = vunpack.c.h.b16 %v289
    %v492 = vunpack.c.l.b16 %v290
    %v493 = vunpack.c.h.b16 %v290
    %v494 = vunpack.c.l.b16 %v291
    %v495 = vunpack.c.h.b16 %v291
    %v496 = vpack.c.b16 %v370, %v368
    %v497 = vpack.c.b16 %v371, %v369
    %v498 = vpack.c.b16 %v374, %v372
    %v499 = vpack.c.b16 %v375, %v373
    %v500 = vpack.c.b16 %v378, %v376
    %v501 = vpack.c.b16 %v379, %v377
    %v502 = vpack.c.b16 %v382, %v380
    %v503 = vpack.c.b16 %v383, %v381
    %v504 = vpack.c.b16 %v386, %v384
    %v505 = vpack.c.b16 %v387, %v385
    %v506 = vpack.c.b16 %v390, %v388
    %v507 = vpack.c.b16 %v391, %v389
    %v508 = vpack.c.b16 %v394, %v392
    %v509 = vpack.c.b16 %v395, %v393
    %v510 = vpack.c.b16 %v398, %v396
    %v511 = vpack.c.b16 %v399, %v397
    %v512 = vpack.c.b16 %v402, %v400
    %v513 = vpack.c.b16 %v403, %v401
    %v514 = vpack.c.b16 %v406, %v404
    %v515 = vpack.c.b16 %v407, %v405
    %v516 = vpack.c.b16 %v410, %v408
    %v517 = vpack.c.b16 %v411, %v409
    %v518 = vpack.c.b16 %v414, %v412
    %v519 = vpack.c.b16 %v415, %v413
    %v520 = vpack.c.b16 %v418, %v416
    %v521 = vpack.c.b16 %v419, %v417
    %v522 = vpack.c.b16 %v422, %v420
    %v523 = vpack.c.b16 %v423, %v421
    %v524 = vpack.c.b16 %v426, %v424
    %v525 = vpack.c.b16 %v427, %v425
    %v526 = vpack.c.b16 %v430, %v428
    %v527 = vpack.c.b16 %v431, %v429
    %v528 = vpack.c.b16 %v434, %v432
    %v529 = vpack.c.b16 %v435, %v433
    %v530 = vpack.c.b16 %v438, %v436
    %v531 = vpack.c.b16 %v439, %v437
    %v532 = vpack.c.b16 %v442, %v440
    %v533 = vpack.c.b16 %v443, %v441
    %v534 = vpack.c.b16 %v446, %v444
    %v535 = vpack.c.b16 %v447, %v445
    %v536 = vpack.c.b16 %v450, %v448
    %v537 = vpack.c.b16 %v451, %v449
    %v538 = vpack.c.b16 %v454, %v452
    %v539 = vpack.c.b16 %v455, %v453
    %v540 = vpack.c.b16 %v458, %v456
    %v541 = vpack.c.b16 %v459, %v457
    %v542 = vpack.c.b16 %v462, %v460
    %v543 = vpack.c.b16 %v463, %v461
    %v544 = vpack.c.b16 %v466, %v464
    %v545 = vpack.c.b16 %v467, %v465
    %v546 = vpack.c.b16 %v470, %v468
    %v547 = vpack.c.b16 %v471, %v469
    %v548 = vpack.c.b16 %v474, %v472
    %v549 = vpack.c.b16 %v475, %v473
    %v550 = vpack.c.b16 %v478, %v476
    %v551 = vpack.c.b16 %v479, %v477
    %v552 = vpack.c.b16 %v482, %v480
    %v553 = vpack.c.b16 %v483, %v481
    %v554 = vpack.c.b16 %v486, %v484
    %v555 = vpack.c.b16 %v487, %v485
    %v556 = vpack.c.b16 %v490, %v488
    %v557 = vpack.c.b16 %v491, %v489
    %v558 = vpack.c.b16 %v494, %v492
    %v559 = vpack.c.b16 %v495, %v493
    %624 = vmatprep.subr.bf16.mxu0 %v497
    %625 = vmatpush1.bf16.msra.mxu0 %v496
    %626 = vmatprep.subr.bf16.mxu0 %v499
    %627 = vmatpush1.bf16.msra.mxu0 %v498
    %628 = vmatprep.subr.bf16.mxu0 %v501
    %629 = vmatpush1.bf16.msra.mxu0 %v500
    %630 = vmatprep.subr.bf16.mxu0 %v503
    %631 = vmatpush1.bf16.msra.mxu0 %v502
    %632 = vmatprep.subr.bf16.mxu0 %v505
    %633 = vmatpush1.bf16.msra.mxu0 %v504
    %634 = vmatprep.subr.bf16.mxu0 %v507
    %635 = vmatpush1.bf16.msra.mxu0 %v506
    %636 = vmatprep.subr.bf16.mxu0 %v509
    %637 = vmatpush1.bf16.msra.mxu0 %v508
    %638 = vmatprep.subr.bf16.mxu0 %v511
    %639 = vmatpush1.bf16.msra.mxu0 %v510
    %640 = vmatprep.subr.bf16.mxu0 %v513
    %641 = vmatpush1.bf16.msra.mxu0 %v512
    %642 = vmatprep.subr.bf16.mxu0 %v515
    %643 = vmatpush1.bf16.msra.mxu0 %v514
    %644 = vmatprep.subr.bf16.mxu0 %v517
    %645 = vmatpush1.bf16.msra.mxu0 %v516
    %646 = vmatprep.subr.bf16.mxu0 %v519
    %647 = vmatpush1.bf16.msra.mxu0 %v518
    %648 = vmatprep.subr.bf16.mxu0 %v521
    %649 = vmatpush1.bf16.msra.mxu0 %v520
    %650 = vmatprep.subr.bf16.mxu0 %v523
    %651 = vmatpush1.bf16.msra.mxu0 %v522
    %652 = vmatprep.subr.bf16.mxu0 %v525
    %653 = vmatpush1.bf16.msra.mxu0 %v524
    %654 = vmatprep.subr.bf16.mxu0 %v527
    %655 = vmatpush1.bf16.msra.mxu0 %v526
    %656 = vmatprep.mubr.bf16.mxu0 %v225
    %657 = vmatmul.mubr.bf16.gmra.mrb[0].mxu0 %v224
    %v658 = vpop.f32.mrb[0].mxu0
    %v659 = vadd.f32 %v297, %v658
    %v660 = vpop.f32.mrb[0].mxu0
    %v661 = vadd.f32 %v301, %v660
    %v662 = vpop.f32.mrb[0].mxu0
    %v663 = vpop.f32.mrb[0].mxu0
    %664 = vdwg.mxu0
    %665 = vmatprep.subr.bf16.mxu0 %v529
    %666 = vmatpush1.bf16.msra.mxu0 %v528
    %667 = vmatprep.subr.bf16.mxu0 %v531
    %668 = vmatpush1.bf16.msra.mxu0 %v530
    %669 = vmatprep.subr.bf16.mxu0 %v533
    %670 = vmatpush1.bf16.msra.mxu0 %v532
    %671 = vmatprep.subr.bf16.mxu0 %v535
    %672 = vmatpush1.bf16.msra.mxu0 %v534
    %673 = vmatprep.subr.bf16.mxu0 %v537
    %674 = vmatpush1.bf16.msra.mxu0 %v536
    %675 = vmatprep.subr.bf16.mxu0 %v539
    %676 = vmatpush1.bf16.msra.mxu0 %v538
    %677 = vmatprep.subr.bf16.mxu0 %v541
    %678 = vmatpush1.bf16.msra.mxu0 %v540
    %679 = vmatprep.subr.bf16.mxu0 %v543
    %680 = vmatpush1.bf16.msra.mxu0 %v542
    %681 = vmatprep.subr.bf16.mxu0 %v545
    %682 = vmatpush1.bf16.msra.mxu0 %v544
    %683 = vmatprep.subr.bf16.mxu0 %v547
    %684 = vmatpush1.bf16.msra.mxu0 %v546
    %685 = vmatprep.subr.bf16.mxu0 %v549
    %686 = vmatpush1.bf16.msra.mxu0 %v548
    %687 = vmatprep.subr.bf16.mxu0 %v551
    %688 = vmatpush1.bf16.msra.mxu0 %v550
    %689 = vmatprep.subr.bf16.mxu0 %v553
    %690 = vmatpush1.bf16.msra.mxu0 %v552
    %691 = vmatprep.subr.bf16.mxu0 %v555
    %692 = vmatpush1.bf16.msra.mxu0 %v554
    %693 = vmatprep.subr.bf16.mxu0 %v557
    %694 = vmatpush1.bf16.msra.mxu0 %v556
    %695 = vmatprep.subr.bf16.mxu0 %v559
    %696 = vmatpush1.bf16.msra.mxu0 %v558
    %697 = vmatprep.mubr.bf16.mxu0 %v227
    %698 = vmatmul.mubr.bf16.gmra.mrb[0].mxu0 %v226
    %v699 = vpop.f32.mrb[0].mxu0
    %v700 = vadd.f32 %v659, %v699
    %v701 = vpop.f32.mrb[0].mxu0
    %v702 = vadd.f32 %v661, %v701
    %v703 = vpop.f32.mrb[0].mxu0
    %v704 = vpop.f32.mrb[0].mxu0
    %705 = vdwg.mxu0
    %v706 = vmax.f32 %v700, 0.0
    %v707 = vmax.f32 %v702, 0.0
    %v708 = vpack.c.bf16 %v706, %v706
    %v709 = vpack.c.bf16 %v707, %v707
    %v710 = vld [vmem:[#allocation5] sm:$0xf]
    %v711 = vld [vmem:[#allocation5 + $0x4] sm:$0xf]
    %v712 = vld [vmem:[#allocation5 + $0x8] sm:$0xf]
    %v713 = vld [vmem:[#allocation5 + $0xc] sm:$0xf]
    %v714 = vld [vmem:[#allocation5 + $0x10] sm:$0xf]
    %v715 = vld [vmem:[#allocation5 + $0x14] sm:$0xf]
    %v716 = vld [vmem:[#allocation5 + $0x18] sm:$0xf]
    %v717 = vld [vmem:[#allocation5 + $0x1c] sm:$0xf]
    %v718 = vld [vmem:[#allocation5 + $0x20] sm:$0xf]
    %v719 = vld [vmem:[#allocation5 + $0x24] sm:$0xf]
    %v720 = vld [vmem:[#allocation5 + $0x28] sm:$0xf]
    %v721 = vld [vmem:[#allocation5 + $0x2c] sm:$0xf]
    %v722 = vld [vmem:[#allocation5 + $0x30] sm:$0xf]
    %v723 = vld [vmem:[#allocation5 + $0x34] sm:$0xf]
    %v724 = vld [vmem:[#allocation5 + $0x38] sm:$0xf]
    %v725 = vld [vmem:[#allocation5 + $0x3c] sm:$0xf]
    %v726 = vld [vmem:[#allocation5 + $0x40] sm:$0xf]
    %v727 = vld [vmem:[#allocation5 + $0x44] sm:$0xf]
    %v728 = vld [vmem:[#allocation5 + $0x48] sm:$0xf]
    %v729 = vld [vmem:[#allocation5 + $0x4c] sm:$0xf]
    %v730 = vld [vmem:[#allocation5 + $0x50] sm:$0xf]
    %v731 = vld [vmem:[#allocation5 + $0x54] sm:$0xf]
    %v732 = vld [vmem:[#allocation5 + $0x58] sm:$0xf]
    %v733 = vld [vmem:[#allocation5 + $0x5c] sm:$0xf]
    %v734 = vld [vmem:[#allocation5 + $0x60] sm:$0xf]
    %v735 = vld [vmem:[#allocation5 + $0x64] sm:$0xf]
    %v736 = vld [vmem:[#allocation5 + $0x68] sm:$0xf]
    %v737 = vld [vmem:[#allocation5 + $0x6c] sm:$0xf]
    %v738 = vld [vmem:[#allocation5 + $0x70] sm:$0xf]
    %v739 = vld [vmem:[#allocation5 + $0x74] sm:$0xf]
    %v740 = vld [vmem:[#allocation5 + $0x78] sm:$0xf]
    %v741 = vld [vmem:[#allocation5 + $0x7c] sm:$0xf]
    %v742 = vld [vmem:[%s6] sm:$0x1]
    %v744 = vlaneseq
    %v745 = vshrl.u32 %v744, 7
    %v746 = vsub.s32 0, %v745
    %v747 = vrot.slane %v742, %v746
    %v781 = vunpack.c.l.b16 %v710
    %v782 = vunpack.c.l.b16 %v711
    %v783 = vunpack.c.l.b16 %v712
    %v784 = vunpack.c.l.b16 %v713
    %v785 = vunpack.c.l.b16 %v714
    %v786 = vunpack.c.l.b16 %v715
    %v787 = vunpack.c.l.b16 %v716
    %v788 = vunpack.c.l.b16 %v717
    %v789 = vunpack.c.l.b16 %v718
    %v790 = vunpack.c.l.b16 %v719
    %v791 = vunpack.c.l.b16 %v720
    %v792 = vunpack.c.l.b16 %v721
    %v793 = vunpack.c.l.b16 %v722
    %v794 = vunpack.c.l.b16 %v723
    %v795 = vunpack.c.l.b16 %v724
    %v796 = vunpack.c.l.b16 %v725
    %v797 = vunpack.c.l.b16 %v726
    %v798 = vunpack.c.l.b16 %v727
    %v799 = vunpack.c.l.b16 %v728
    %v800 = vunpack.c.l.b16 %v729
    %v801 = vunpack.c.l.b16 %v730
    %v802 = vunpack.c.l.b16 %v731
    %v803 = vunpack.c.l.b16 %v732
    %v804 = vunpack.c.l.b16 %v733
    %v805 = vunpack.c.l.b16 %v734
    %v806 = vunpack.c.l.b16 %v735
    %v807 = vunpack.c.l.b16 %v736
    %v808 = vunpack.c.l.b16 %v737
    %v809 = vunpack.c.l.b16 %v738
    %v810 = vunpack.c.l.b16 %v739
    %v811 = vunpack.c.l.b16 %v740
    %v812 = vunpack.c.l.b16 %v741
    %v813 = vpack.c.b16 %v782, %v781
    %v814 = vpack.c.b16 %v784, %v783
    %v815 = vpack.c.b16 %v786, %v785
    %v816 = vpack.c.b16 %v788, %v787
    %v817 = vpack.c.b16 %v790, %v789
    %v818 = vpack.c.b16 %v792, %v791
    %v819 = vpack.c.b16 %v794, %v793
    %v820 = vpack.c.b16 %v796, %v795
    %v821 = vpack.c.b16 %v798, %v797
    %v822 = vpack.c.b16 %v800, %v799
    %v823 = vpack.c.b16 %v802, %v801
    %v824 = vpack.c.b16 %v804, %v803
    %v825 = vpack.c.b16 %v806, %v805
    %v826 = vpack.c.b16 %v808, %v807
    %v827 = vpack.c.b16 %v810, %v809
    %v828 = vpack.c.b16 %v812, %v811
    %845 = vmatprep.subr.bf16.mxu0 0
    %846 = vmatpush1.bf16.msra.mxu0 %v813
    %847 = vmatprep.subr.bf16.mxu0 0
    %848 = vmatpush1.bf16.msra.mxu0 %v814
    %849 = vmatprep.subr.bf16.mxu0 0
    %850 = vmatpush1.bf16.msra.mxu0 %v815
    %851 = vmatprep.subr.bf16.mxu0 0
    %852 = vmatpush1.bf16.msra.mxu0 %v816
    %853 = vmatprep.subr.bf16.mxu0 0
    %854 = vmatpush1.bf16.msra.mxu0 %v817
    %855 = vmatprep.subr.bf16.mxu0 0
    %856 = vmatpush1.bf16.msra.mxu0 %v818
    %857 = vmatprep.subr.bf16.mxu0 0
    %858 = vmatpush1.bf16.msra.mxu0 %v819
    %859 = vmatprep.subr.bf16.mxu0 0
    %860 = vmatpush1.bf16.msra.mxu0 %v820
    %861 = vmatprep.subr.bf16.mxu0 0
    %862 = vmatpush1.bf16.msra.mxu0 %v821
    %863 = vmatprep.subr.bf16.mxu0 0
    %864 = vmatpush1.bf16.msra.mxu0 %v822
    %865 = vmatprep.subr.bf16.mxu0 0
    %866 = vmatpush1.bf16.msra.mxu0 %v823
    %867 = vmatprep.subr.bf16.mxu0 0
    %868 = vmatpush1.bf16.msra.mxu0 %v824
    %869 = vmatprep.subr.bf16.mxu0 0
    %870 = vmatpush1.bf16.msra.mxu0 %v825
    %871 = vmatprep.subr.bf16.mxu0 0
    %872 = vmatpush1.bf16.msra.mxu0 %v826
    %873 = vmatprep.subr.bf16.mxu0 0
    %874 = vmatpush1.bf16.msra.mxu0 %v827
    %875 = vmatprep.subr.bf16.mxu0 0
    %876 = vmatpush1.bf16.msra.mxu0 %v828
    %877 = vmatprep.mubr.bf16.mxu0 %v709
    %878 = vmatmul.mubr.bf16.gmra.mrb[0].mxu0 %v708
    %v879 = vpop.f32.mrb[0].mxu0
    %v880 = vadd.f32 %v747, %v879
    %v881 = vpop.f32.mrb[0].mxu0
    %v882 = vpop.f32.mrb[0].mxu0
    %v883 = vpop.f32.mrb[0].mxu0
    %884 = vdwg.mxu0
    %v885 = vmax.f32 %v880, 0.0
    %v886 = vpack.c.bf16 %v885, %v885
    %v887 = vld [vmem:[%s7] sm:$0xf]
    %v888 = vld [vmem:[%s7 + $0x4] sm:$0xf]
    %v889 = vld [vmem:[%s7 + $0x8] sm:$0xf]
    %v890 = vld [vmem:[%s7 + $0xc] sm:$0xf]
    %v891 = vld [vmem:[%s7 + $0x10] sm:$0xf]
    %v892 = vld [vmem:[%s7 + $0x14] sm:$0xf]
    %v893 = vld [vmem:[%s7 + $0x18] sm:$0xf]
    %v894 = vld [vmem:[%s7 + $0x1c] sm:$0xf]
    %v895 = vld [vmem:[%s7 + $0x20] sm:$0xf]
    %v896 = vld [vmem:[%s7 + $0x24] sm:$0xf]
    %v897 = vld [vmem:[%s7 + $0x28] sm:$0xf]
    %v898 = vld [vmem:[%s7 + $0x2c] sm:$0xf]
    %v899 = vld [vmem:[%s7 + $0x30] sm:$0xf]
    %v900 = vld [vmem:[%s7 + $0x34] sm:$0xf]
    %v901 = vld [vmem:[%s7 + $0x38] sm:$0xf]
    %v902 = vld [vmem:[%s7 + $0x3c] sm:$0xf]
    %v903 = vld [vmem:[%s8] sm:$0x1]
    %v905 = vlaneseq
    %v906 = vshrl.u32 %v905, 7
    %v907 = vsub.s32 0, %v906
    %v908 = vrot.slane %v903, %v907
    %v926 = vunpack.c.l.b16 %v887
    %v927 = vunpack.c.l.b16 %v888
    %v928 = vunpack.c.l.b16 %v889
    %v929 = vunpack.c.l.b16 %v890
    %v930 = vunpack.c.l.b16 %v891
    %v931 = vunpack.c.l.b16 %v892
    %v932 = vunpack.c.l.b16 %v893
    %v933 = vunpack.c.l.b16 %v894
    %v934 = vunpack.c.l.b16 %v895
    %v935 = vunpack.c.l.b16 %v896
    %v936 = vunpack.c.l.b16 %v897
    %v937 = vunpack.c.l.b16 %v898
    %v938 = vunpack.c.l.b16 %v899
    %v939 = vunpack.c.l.b16 %v900
    %v940 = vunpack.c.l.b16 %v901
    %v941 = vunpack.c.l.b16 %v902
    %v942 = vpack.c.b16 %v927, %v926
    %v943 = vpack.c.b16 %v929, %v928
    %v944 = vpack.c.b16 %v931, %v930
    %v945 = vpack.c.b16 %v933, %v932
    %v946 = vpack.c.b16 %v935, %v934
    %v947 = vpack.c.b16 %v937, %v936
    %v948 = vpack.c.b16 %v939, %v938
    %v949 = vpack.c.b16 %v941, %v940
    %958 = vmatprep.subr.bf16.mxu0 0
    %959 = vmatpush1.bf16.msra.mxu0 %v942
    %960 = vmatprep.subr.bf16.mxu0 0
    %961 = vmatpush1.bf16.msra.mxu0 %v943
    %962 = vmatprep.subr.bf16.mxu0 0
    %963 = vmatpush1.bf16.msra.mxu0 %v944
    %964 = vmatprep.subr.bf16.mxu0 0
    %965 = vmatpush1.bf16.msra.mxu0 %v945
    %966 = vmatprep.subr.bf16.mxu0 0
    %967 = vmatpush1.bf16.msra.mxu0 %v946
    %968 = vmatprep.subr.bf16.mxu0 0
    %969 = vmatpush1.bf16.msra.mxu0 %v947
    %970 = vmatprep.subr.bf16.mxu0 0
    %971 = vmatpush1.bf16.msra.mxu0 %v948
    %972 = vmatprep.subr.bf16.mxu0 0
    %973 = vmatpush1.bf16.msra.mxu0 %v949
    %974 = vmatprep.subr.bf16.mxu0 0
    %975 = vmatpush1.bf16.msra.mxu0 0
    %976 = vmatprep.subr.bf16.mxu0 0
    %977 = vmatpush1.bf16.msra.mxu0 0
    %978 = vmatprep.subr.bf16.mxu0 0
    %979 = vmatpush1.bf16.msra.mxu0 0
    %980 = vmatprep.subr.bf16.mxu0 0
    %981 = vmatpush1.bf16.msra.mxu0 0
    %982 = vmatprep.subr.bf16.mxu0 0
    %983 = vmatpush1.bf16.msra.mxu0 0
    %984 = vmatprep.subr.bf16.mxu0 0
    %985 = vmatpush1.bf16.msra.mxu0 0
    %986 = vmatprep.subr.bf16.mxu0 0
    %987 = vmatpush1.bf16.msra.mxu0 0
    %988 = vmatprep.subr.bf16.mxu0 0
    %989 = vmatpush1.bf16.msra.mxu0 0
    %990 = vmatprep.mubr.bf16.mxu0 0
    %991 = vmatmul.mubr.bf16.gmra.mrb[0].mxu0 %v886
    %v992 = vpop.f32.mrb[0].mxu0
    %v993 = vadd.f32 %v908, %v992
    %v994 = vpop.f32.mrb[0].mxu0
    %v995 = vpop.f32.mrb[0].mxu0
    %v996 = vpop.f32.mrb[0].mxu0
    %997 = vdwg.mxu0
    %vm998 = vcmask 80896
    %999 = vst.msk [vmem:[#allocation7] sm:$0xff] %vm998, %v993
    // Predicated region
    $region46: #{tpu_custom_call.1} parent=1 // pred_check
      _
    $region47: #{tpu_custom_call.1} parent=1 // pred_check_branch
      %1001 = sbr.rel (0) target = $region49
    $region48: #{tpu_custom_call.1} parent=1 // pred_region
      %s1003 = ssub.s32 128, 128
      %1004 = vsyncadd [#allocation4], %s1003
      %s1006 = sshll.u32 [#allocation7], 4
      %s1007 = int_to_ptr.vmem [resolvable:$true] %s1006
      %1009 = dma.vmem_to_hbm [thread:$0]  %s1007, 128, %s9, [#allocation4]
    $region49: #{tpu_custom_call.1} parent=1 // pred_fallthru
      _
    // Predicated region
    $region50: #{tpu_custom_call.1} parent=1 // pred_check
      _
    $region51: #{tpu_custom_call.1} parent=1 // pred_check_branch
      %1011 = sbr.rel (0) target = $region53
    $region52: #{tpu_custom_call.1} parent=1 // pred_region
      %1012 = dma.done [#allocation4], 128
    $region53: #{tpu_custom_call.1} parent=1 // pred_fallthru
      _
    %1013 = vsyncpa [#allocation3], 1
    %1014 = vsyncpa [#allocation6], 1
    %1015 = vsyncpa [#allocation4], 1

</llo_original>
